<compile_context>
chip_gen: v5e
topology: v5e:2x2
jax: 0.10.0
libtpu: 0.0.40
codegen_flags: <defaults>
</compile_context>

<pallas_src>
import jax
import jax.numpy as jnp
from jax.experimental import pallas as pl
from jax.experimental.pallas import tpu as pltpu

INPUT_SIZE = 351
HIDDEN_SIZE = 64
OUTPUT_SIZE = 18
BN_EPS = 1e-5

DEFAULT_TB_MAX = 2048   # batch-tile cap: fits v5e/v6e/v7x scoped VMEM with headroom


def _cdiv(a, b):
    return (a + b - 1) // b


def _round_up(n, m):
    return ((n + m - 1) // m) * m


def _pick_tb(B, tb_max):
    """Batch tile: multiple of 8, >=2 grid tiles when possible (v7x dual-TC),
    and <=7 rows of remainder waste."""
    if B <= 8:
        return 8
    ntiles = max(2, _cdiv(B, tb_max))
    return _round_up(_cdiv(B, ntiles), 8)


def _mlp_kernel(x_ref, w1_ref, b1_ref, w2_ref, b2_ref, w3_ref, b3_ref, out_ref):
    x = x_ref[...]                                                # [TB, 351]

    # fc1 + ReLU (MXU, f32 accumulate; bf16-native when inputs are bf16)
    h1 = jnp.dot(x, w1_ref[...], preferred_element_type=jnp.float32) + b1_ref[...]
    h1 = jnp.maximum(h1, 0.0)

    # dropout(0.5) -> identity in eval mode

    # fc2 + ReLU
    h2 = jnp.dot(h1.astype(w2_ref.dtype), w2_ref[...],
                 preferred_element_type=jnp.float32) + b2_ref[...]
    h2 = jnp.maximum(h2, 0.0)

    # fc3 (eval-mode BatchNorm already folded into w3/b3 on the host)
    logits = jnp.dot(h2.astype(w3_ref.dtype), w3_ref[...],
                     preferred_element_type=jnp.float32) + b3_ref[...]

    # softmax over dim=1 (last axis), numerically stable
    m = jnp.max(logits, axis=-1, keepdims=True)
    e = jnp.exp(logits - m)
    denom = jnp.sum(e, axis=-1, keepdims=True)
    out_ref[...] = (e * pl.reciprocal(denom, approx=False)).astype(out_ref.dtype)


def prepare_params(params, compute_dtype=jnp.bfloat16):
    """One-off host-side prep (call once, reuse across forward calls):
    fold eval-mode BatchNorm into fc3 and cast weights to the compute dtype."""
    (w1, b1, w2, b2, gamma, beta, rmean, rvar, w3, b3) = params

    # h_bn = (h - rmean)*scale + beta
    #   logits = h_bn @ w3 + b3 = h @ (scale^T * w3) + ((beta - rmean*scale) @ w3 + b3)
    scale = gamma * jax.lax.rsqrt(rvar + BN_EPS)                  # [1, 64]
    w3f = w3 * scale.reshape(HIDDEN_SIZE, 1)                      # [64, 18]
    b3f = b3 + (beta - rmean * scale) @ w3                        # [1, 18]

    cd = compute_dtype
    return (w1.astype(cd), b1.astype(jnp.float32),
            w2.astype(cd), b2.astype(jnp.float32),
            w3f.astype(cd), b3f.astype(jnp.float32))


def rubiks_move_predictor(x, prepared, *, block_batch=DEFAULT_TB_MAX):
    """x: [B, 351]. prepared: output of prepare_params. Returns probabilities [B, 18]."""
    w1, b1, w2, b2, w3, b3 = prepared
    B = x.shape[0]

    # Cast x to the compute dtype (no-op if caller already provides bf16; for
    # large-B throughput produce x in bf16 upstream so this fuses away).
    x = x.astype(w1.dtype)

    TB = _pick_tb(B, block_batch)
    num_tiles = _cdiv(B, TB)                     # ragged final block is allowed

    resident = lambda shape: pl.BlockSpec(shape, lambda i: (0, 0))
    return pl.pallas_call(
        _mlp_kernel,
        out_shape=jax.ShapeDtypeStruct((B, OUTPUT_SIZE), jnp.float32),
        grid=(num_tiles,),
        in_specs=[
            pl.BlockSpec((TB, INPUT_SIZE), lambda i: (i, 0)),     # x: streamed, K=351 unpadded
            resident((INPUT_SIZE, HIDDEN_SIZE)),                  # w1 (VMEM-resident)
            resident((1, HIDDEN_SIZE)),                           # b1
            resident((HIDDEN_SIZE, HIDDEN_SIZE)),                 # w2
            resident((1, HIDDEN_SIZE)),                           # b2
            resident((HIDDEN_SIZE, OUTPUT_SIZE)),                 # w3 (BN-folded)
            resident((1, OUTPUT_SIZE)),                           # b3 (BN-folded)
        ],
        out_specs=pl.BlockSpec((TB, OUTPUT_SIZE), lambda i: (i, 0)),
        compiler_params=pltpu.CompilerParams(
            dimension_semantics=("parallel",),
            vmem_limit_bytes=32 << 20,
        ),
    )(x, w1, b1, w2, b2, w3, b3)


def init_params(key):
    """Deterministic synthetic parameters with PyTorch nn.Linear shapes,
    pre-transposed to [in, out] for the kernel."""
    ks = jax.random.split(key, 8)

    def linear(kw, kb, fan_in, fan_out):
        bound = 1.0 / jnp.sqrt(fan_in)
        w = jax.random.uniform(kw, (fan_in, fan_out), jnp.float32, -bound, bound)
        b = jax.random.uniform(kb, (1, fan_out), jnp.float32, -bound, bound)
        return w, b

    w1, b1 = linear(ks[0], ks[1], INPUT_SIZE, HIDDEN_SIZE)
    w2, b2 = linear(ks[2], ks[3], HIDDEN_SIZE, HIDDEN_SIZE)
    w3, b3 = linear(ks[4], ks[5], HIDDEN_SIZE, OUTPUT_SIZE)

    # BatchNorm1d(hidden_size): affine params + nontrivial running stats so the
    # normalization path is actually exercised.
    gamma = 1.0 + 0.1 * jax.random.normal(ks[6], (1, HIDDEN_SIZE), jnp.float32)
    beta = 0.1 * jax.random.normal(ks[7], (1, HIDDEN_SIZE), jnp.float32)
    rmean = 0.05 * jnp.arange(HIDDEN_SIZE, dtype=jnp.float32).reshape(1, HIDDEN_SIZE)
    rvar = 1.0 + 0.01 * jnp.arange(HIDDEN_SIZE, dtype=jnp.float32).reshape(1, HIDDEN_SIZE)

    return (w1, b1, w2, b2, gamma, beta, rmean, rvar, w3, b3)


def reference_forward(x, params):
    """Pure-JAX f32 reference (unfolded BN)."""
    (w1, b1, w2, b2, gamma, beta, rmean, rvar, w3, b3) = params
    h = jnp.maximum(x @ w1 + b1, 0.0)
    h = jnp.maximum(h @ w2 + b2, 0.0)
    h = (h - rmean) / jnp.sqrt(rvar + BN_EPS) * gamma + beta
    logits = h @ w3 + b3
    return jax.nn.softmax(logits, axis=1)


if __name__ == "__main__":
    key = jax.random.PRNGKey(0)
    kx, kp = jax.random.split(key)

    B = 10  # not a multiple of 8: exercises the ragged final block + 2 grid tiles
    x = jax.random.normal(kx, (B, INPUT_SIZE), dtype=jnp.float32)
    params = init_params(kp)
    ref = reference_forward(x, params)

    # Fast path: bf16 weights/activations, f32 accumulation.
    out_bf16 = rubiks_move_predictor(x, prepare_params(params, jnp.bfloat16))
    out_bf16 = jax.block_until_ready(out_bf16)

    # Full-precision path: same kernel, f32 end-to-end (tight numerics check).
    out_f32 = rubiks_move_predictor(x, prepare_params(params, jnp.float32))
    out_f32 = jax.block_until_ready(out_f32)

    assert out_bf16.shape == (B, OUTPUT_SIZE)
    assert out_f32.shape == (B, OUTPUT_SIZE)
    assert jnp.allclose(jnp.sum(out_bf16, axis=1), 1.0, atol=1e-3)
    assert jnp.allclose(jnp.sum(out_f32, axis=1), 1.0, atol=1e-5)
    assert jnp.allclose(out_f32, ref, atol=1e-5, rtol=1e-5)
    assert jnp.allclose(out_bf16, ref, atol=2e-2, rtol=2e-2)   # bf16 error budget

    print("KERNEL_OK")
</pallas_src>

<mosaic_0001>
module attributes {stable_mosaic.version = 11 : i64} {
  func.func @_mlp_kernel(%arg0: i32, %arg1: memref<8x351xbf16, #tpu.memory_space<vmem>>, %arg2: memref<351x64xbf16, #tpu.memory_space<vmem>>, %arg3: memref<1x64xf32, #tpu.memory_space<vmem>>, %arg4: memref<64x64xbf16, #tpu.memory_space<vmem>>, %arg5: memref<1x64xf32, #tpu.memory_space<vmem>>, %arg6: memref<64x18xbf16, #tpu.memory_space<vmem>>, %arg7: memref<1x18xf32, #tpu.memory_space<vmem>>, %arg8: memref<8x18xf32, #tpu.memory_space<vmem>>) attributes {dimension_semantics = [#tpu.dimension_semantics<parallel>], iteration_bounds = array<i64: 2>, scalar_prefetch = 0 : i64, scratch_operands = 0 : i64, tpu.core_type = #tpu.core_type<tc>, window_params = [{transform_indices = @transform_0, window_bounds = array<i64: 8, 351>}, {pipeline_mode = #tpu.pipeline_mode<synchronous>, transform_indices = @transform_1, window_bounds = array<i64: 351, 64>}, {pipeline_mode = #tpu.pipeline_mode<synchronous>, transform_indices = @transform_2, window_bounds = array<i64: 1, 64>}, {pipeline_mode = #tpu.pipeline_mode<synchronous>, transform_indices = @transform_3, window_bounds = array<i64: 64, 64>}, {pipeline_mode = #tpu.pipeline_mode<synchronous>, transform_indices = @transform_4, window_bounds = array<i64: 1, 64>}, {pipeline_mode = #tpu.pipeline_mode<synchronous>, transform_indices = @transform_5, window_bounds = array<i64: 64, 18>}, {pipeline_mode = #tpu.pipeline_mode<synchronous>, transform_indices = @transform_6, window_bounds = array<i64: 1, 18>}, {transform_indices = @transform_7, window_bounds = array<i64: 8, 18>}]} {
    %c0 = arith.constant 0 : index
    %c0_0 = arith.constant 0 : index
    %0 = vector.load %arg1[%c0, %c0_0] : memref<8x351xbf16, #tpu.memory_space<vmem>>, vector<8x351xbf16>
    %c0_1 = arith.constant 0 : index
    %c0_2 = arith.constant 0 : index
    %1 = vector.load %arg2[%c0_1, %c0_2] : memref<351x64xbf16, #tpu.memory_space<vmem>>, vector<351x64xbf16>
    %cst = arith.constant dense<0.000000e+00> : vector<8x64xf32>
    %2 = tpu.matmul %0, %1, %cst {dimension_numbers = #tpu.dot_dimension_numbers<[1], [0], [0], [1], [0, 0, 1, 1], [], []>} : vector<8x351xbf16>, vector<351x64xbf16>, vector<8x64xf32> -> vector<8x64xf32>
    %c0_3 = arith.constant 0 : index
    %c0_4 = arith.constant 0 : index
    %3 = vector.load %arg3[%c0_3, %c0_4] : memref<1x64xf32, #tpu.memory_space<vmem>>, vector<1x64xf32>
    %4 = vector.broadcast %3 : vector<1x64xf32> to vector<8x64xf32>
    %5 = arith.addf %2, %4 : vector<8x64xf32>
    %cst_5 = arith.constant 0.000000e+00 : f32
    %6 = vector.broadcast %cst_5 : f32 to vector<8x64xf32>
    %7 = arith.maximumf %5, %6 : vector<8x64xf32>
    %8 = arith.truncf %7 : vector<8x64xf32> to vector<8x64xbf16>
    %c0_6 = arith.constant 0 : index
    %c0_7 = arith.constant 0 : index
    %9 = vector.load %arg4[%c0_6, %c0_7] : memref<64x64xbf16, #tpu.memory_space<vmem>>, vector<64x64xbf16>
    %cst_8 = arith.constant dense<0.000000e+00> : vector<8x64xf32>
    %10 = tpu.matmul %8, %9, %cst_8 {dimension_numbers = #tpu.dot_dimension_numbers<[1], [0], [0], [1], [0, 0, 1, 1], [], []>} : vector<8x64xbf16>, vector<64x64xbf16>, vector<8x64xf32> -> vector<8x64xf32>
    %c0_9 = arith.constant 0 : index
    %c0_10 = arith.constant 0 : index
    %11 = vector.load %arg5[%c0_9, %c0_10] : memref<1x64xf32, #tpu.memory_space<vmem>>, vector<1x64xf32>
    %12 = vector.broadcast %11 : vector<1x64xf32> to vector<8x64xf32>
    %13 = arith.addf %10, %12 : vector<8x64xf32>
    %cst_11 = arith.constant 0.000000e+00 : f32
    %14 = vector.broadcast %cst_11 : f32 to vector<8x64xf32>
    %15 = arith.maximumf %13, %14 : vector<8x64xf32>
    %16 = arith.truncf %15 : vector<8x64xf32> to vector<8x64xbf16>
    %c0_12 = arith.constant 0 : index
    %c0_13 = arith.constant 0 : index
    %17 = vector.load %arg6[%c0_12, %c0_13] : memref<64x18xbf16, #tpu.memory_space<vmem>>, vector<64x18xbf16>
    %cst_14 = arith.constant dense<0.000000e+00> : vector<8x18xf32>
    %18 = tpu.matmul %16, %17, %cst_14 {dimension_numbers = #tpu.dot_dimension_numbers<[1], [0], [0], [1], [0, 0, 1, 1], [], []>} : vector<8x64xbf16>, vector<64x18xbf16>, vector<8x18xf32> -> vector<8x18xf32>
    %c0_15 = arith.constant 0 : index
    %c0_16 = arith.constant 0 : index
    %19 = vector.load %arg7[%c0_15, %c0_16] : memref<1x18xf32, #tpu.memory_space<vmem>>, vector<1x18xf32>
    %20 = vector.broadcast %19 : vector<1x18xf32> to vector<8x18xf32>
    %21 = arith.addf %18, %20 : vector<8x18xf32>
    %cst_17 = arith.constant dense<0xFF800000> : vector<8xf32>
    %22 = vector.multi_reduction <maximumf>, %21, %cst_17 [1] : vector<8x18xf32> to vector<8xf32>
    %23 = vector.shape_cast %22 : vector<8xf32> to vector<8x1xf32>
    %24 = vector.broadcast %23 : vector<8x1xf32> to vector<8x18xf32>
    %25 = arith.subf %21, %24 : vector<8x18xf32>
    %26 = math.exp %25 : vector<8x18xf32>
    %cst_18 = arith.constant dense<0.000000e+00> : vector<8xf32>
    %27 = vector.multi_reduction <add>, %26, %cst_18 [1] : vector<8x18xf32> to vector<8xf32>
    %28 = vector.shape_cast %27 : vector<8xf32> to vector<8x1xf32>
    %29 = tpu.reciprocal %28 : vector<8x1xf32> -> vector<8x1xf32>
    %30 = vector.broadcast %29 : vector<8x1xf32> to vector<8x18xf32>
    %31 = arith.mulf %26, %30 : vector<8x18xf32>
    %c0_19 = arith.constant 0 : index
    %c0_20 = arith.constant 0 : index
    %32 = vector.load %arg8[%c0_19, %c0_20] : memref<8x18xf32, #tpu.memory_space<vmem>>, vector<8x18xf32>
    tpu.vector_store %arg8[%c0_19, %c0_20], %31 {strides = array<i32>} : memref<8x18xf32, #tpu.memory_space<vmem>>, vector<8x18xf32>,
    return
  }
  func.func @transform_0(%arg0: i32) -> (i32, i32) {
    %c0_i32 = arith.constant 0 : i32
    %c0_i32_0 = arith.constant 0 : i32
    return %arg0, %c0_i32 : i32, i32
  }
  func.func @transform_1(%arg0: i32) -> (i32, i32) {
    %c0_i32 = arith.constant 0 : i32
    %c0_i32_0 = arith.constant 0 : i32
    %c0_i32_1 = arith.constant 0 : i32
    return %c0_i32, %c0_i32_0 : i32, i32
  }
  func.func @transform_2(%arg0: i32) -> (i32, i32) {
    %c0_i32 = arith.constant 0 : i32
    %c0_i32_0 = arith.constant 0 : i32
    %c0_i32_1 = arith.constant 0 : i32
    return %c0_i32, %c0_i32_0 : i32, i32
  }
  func.func @transform_3(%arg0: i32) -> (i32, i32) {
    %c0_i32 = arith.constant 0 : i32
    %c0_i32_0 = arith.constant 0 : i32
    %c0_i32_1 = arith.constant 0 : i32
    return %c0_i32, %c0_i32_0 : i32, i32
  }
  func.func @transform_4(%arg0: i32) -> (i32, i32) {
    %c0_i32 = arith.constant 0 : i32
    %c0_i32_0 = arith.constant 0 : i32
    %c0_i32_1 = arith.constant 0 : i32
    return %c0_i32, %c0_i32_0 : i32, i32
  }
  func.func @transform_5(%arg0: i32) -> (i32, i32) {
    %c0_i32 = arith.constant 0 : i32
    %c0_i32_0 = arith.constant 0 : i32
    %c0_i32_1 = arith.constant 0 : i32
    return %c0_i32, %c0_i32_0 : i32, i32
  }
  func.func @transform_6(%arg0: i32) -> (i32, i32) {
    %c0_i32 = arith.constant 0 : i32
    %c0_i32_0 = arith.constant 0 : i32
    %c0_i32_1 = arith.constant 0 : i32
    return %c0_i32, %c0_i32_0 : i32, i32
  }
  func.func @transform_7(%arg0: i32) -> (i32, i32) {
    %c0_i32 = arith.constant 0 : i32
    %c0_i32_0 = arith.constant 0 : i32
    return %arg0, %c0_i32 : i32, i32
  }
}

</mosaic_0001>

<llo_original>
// kernel: tpu_custom_call.1
$region0: #{tpu_custom_call.1}
  #allocation0 [shape = 'u32[]', space=smem, size = 0x4, offset = 0x4, fixed_abs, tag = 'smem constant byte address 0x4 - core index']
  #allocation1 [shape = 'u32[72,128]{1,0:T(1,128)}', space=vmem, size = 0x9000, scoped, tag = 'internal scratch']
  %s0 = inlined_call_operand.vmem [shape: bf16[10,351], index: 0, kind: input, shape index: {}]
  %s1 = inlined_call_operand.vmem [shape: bf16[351,64], index: 1, kind: input, shape index: {}]
  %s2 = inlined_call_operand.vmem [shape: f32[1,64], index: 2, kind: input, shape index: {}]
  %s3 = inlined_call_operand.vmem [shape: bf16[64,64], index: 3, kind: input, shape index: {}]
  %s4 = inlined_call_operand.vmem [shape: f32[1,64], index: 4, kind: input, shape index: {}]
  %s5 = inlined_call_operand.vmem [shape: bf16[64,18], index: 5, kind: input, shape index: {}]
  %s6 = inlined_call_operand.vmem [shape: f32[1,18], index: 6, kind: input, shape index: {}]
  %s7 = inlined_call_operand.hbm [shape: f32[10,18], index: 7, kind: output, shape index: {}]
  %s8 = sld [smem:[#allocation0]]
  $region61: #{tpu_custom_call.1} parent=0
    _
  %s10 = ssub.s32 1, %s8
  %s11 = scalar_select 0, %s10, %s8
  $region1: #{tpu_custom_call.1} parent=0
    #allocation2 [shape = 'u8[8192]{0}', space=vmem, size = 0x2000, scoped, tag = 'output window, operand 0']
    #allocation3 [shape = 's32[2]{0}', space=sflag, size = 0x8, scoped, tag = 'scoped memory for tpu_custom_call.1']
    %12 = vsyncpa [#allocation3], 0
    %s13 = scalar_lea.sflag [#allocation3], 1
    %14 = vsyncpa %s13, 0
    loop: start=0, step=1, limit=4
    $region2: #{tpu_custom_call.1} parent=1 // loop_pre_header
      _
    $region3: #{tpu_custom_call.1} parent=1 // loop_header
      %s16 = sphi 0, %s20
      %p17 = scmp.ge.s32.totalorder %s16, 4
      %s26 = sphi 0, %s28
      %s29 = sphi 0, %s26
      %s30 = sphi 0, %s29
      %s46 = sphi 0, %s30
      %s50 = sphi 0, %s50
      %s52 = sphi 0, %s50
      %s53 = sphi 0, %s52
      %s67 = sphi 0, %s53
      %s71 = sphi 0, %s71
      %s73 = sphi 0, %s71
      %s74 = sphi 0, %s73
      %s88 = sphi 0, %s74
      %s92 = sphi 0, %s92
      %s94 = sphi 0, %s92
      %s95 = sphi 0, %s94
      %s109 = sphi 0, %s95
      %s113 = sphi 0, %s113
      %s115 = sphi 0, %s113
      %s116 = sphi 0, %s115
      %s130 = sphi 0, %s116
      %s134 = sphi 0, %s134
      %s136 = sphi 0, %s134
      %s137 = sphi 0, %s136
      %s151 = sphi 0, %s137
      %s155 = sphi 0, %s155
      %s157 = sphi 0, %s155
      %s158 = sphi 0, %s157
      %s172 = sphi 0, %s158
      %s178 = sphi 0, %s180
      %s181 = sphi 0, %s178
      %s182 = sphi 0, %s181
      %s198 = sphi 0, %s182
    $region4: #{tpu_custom_call.1} parent=1 // loop_header_branch
      %19 = sbr.rel (%p17) target = $region8
    $region5: #{tpu_custom_call.1} parent=1 // loop_body
      %s21 = ssub.s32 %s16, 1
      %s22 = ssub.s32 %s16, 2
      %s23 = sadd.s32 %s16, 1
      %s24 = ssub.s32 %s16, %s23
      %p25 = scmp.eq.s32.totalorder %s24, 0
      %s27 = sadd.s32 %s26, 1
      %s28 = scalar_select %p25, %s26, %s27
      %p31 = pneg %p25
      %p32 = scmp.eq.s32.totalorder %s16, 1
      %p33 = por %p31, %p32
      %p34 = scmp.ne.s32.totalorder %s26, %s29
      %p35 = scmp.eq.s32.totalorder %s16, 0
      %p36 = por %p34, %p35
      %p37 = scmp.ne.s32.totalorder %s26, %s29
      %p38 = scmp.eq.s32.totalorder %s21, 1
      %p39 = por %p37, %p38
      %p40 = scmp.ne.s32.totalorder %s29, %s30
      %p41 = scmp.eq.s32.totalorder %s21, 0
      %p42 = por %p40, %p41
      %p43 = scmp.ne.s32.totalorder %s29, %s30
      %p44 = scmp.eq.s32.totalorder %s22, 1
      %p45 = por %p43, %p44
      %p47 = scmp.ne.s32.totalorder %s30, %s46
      %p48 = scmp.eq.s32.totalorder %s22, 0
      %p49 = por %p47, %p48
      %s51 = sadd.s32 %s50, 1
      %p54 = scmp.eq.s32.totalorder %s16, 1
      %p55 = scmp.ne.s32.totalorder %s50, %s52
      %p56 = scmp.eq.s32.totalorder %s16, 0
      %p57 = por %p55, %p56
      %p58 = scmp.ne.s32.totalorder %s50, %s52
      %p59 = scmp.eq.s32.totalorder %s21, 1
      %p60 = por %p58, %p59
      %p61 = scmp.ne.s32.totalorder %s52, %s53
      %p62 = scmp.eq.s32.totalorder %s21, 0
      %p63 = por %p61, %p62
      %p64 = scmp.ne.s32.totalorder %s52, %s53
      %p65 = scmp.eq.s32.totalorder %s22, 1
      %p66 = por %p64, %p65
      %p68 = scmp.ne.s32.totalorder %s53, %s67
      %p69 = scmp.eq.s32.totalorder %s22, 0
      %p70 = por %p68, %p69
      %s72 = sadd.s32 %s71, 1
      %p75 = scmp.eq.s32.totalorder %s16, 1
      %p76 = scmp.ne.s32.totalorder %s71, %s73
      %p77 = scmp.eq.s32.totalorder %s16, 0
      %p78 = por %p76, %p77
      %p79 = scmp.ne.s32.totalorder %s71, %s73
      %p80 = scmp.eq.s32.totalorder %s21, 1
      %p81 = por %p79, %p80
      %p82 = scmp.ne.s32.totalorder %s73, %s74
      %p83 = scmp.eq.s32.totalorder %s21, 0
      %p84 = por %p82, %p83
      %p85 = scmp.ne.s32.totalorder %s73, %s74
      %p86 = scmp.eq.s32.totalorder %s22, 1
      %p87 = por %p85, %p86
      %p89 = scmp.ne.s32.totalorder %s74, %s88
      %p90 = scmp.eq.s32.totalorder %s22, 0
      %p91 = por %p89, %p90
      %s93 = sadd.s32 %s92, 1
      %p96 = scmp.eq.s32.totalorder %s16, 1
      %p97 = scmp.ne.s32.totalorder %s92, %s94
      %p98 = scmp.eq.s32.totalorder %s16, 0
      %p99 = por %p97, %p98
      %p100 = scmp.ne.s32.totalorder %s92, %s94
      %p101 = scmp.eq.s32.totalorder %s21, 1
      %p102 = por %p100, %p101
      %p103 = scmp.ne.s32.totalorder %s94, %s95
      %p104 = scmp.eq.s32.totalorder %s21, 0
      %p105 = por %p103, %p104
      %p106 = scmp.ne.s32.totalorder %s94, %s95
      %p107 = scmp.eq.s32.totalorder %s22, 1
      %p108 = por %p106, %p107
      %p110 = scmp.ne.s32.totalorder %s95, %s109
      %p111 = scmp.eq.s32.totalorder %s22, 0
      %p112 = por %p110, %p111
      %s114 = sadd.s32 %s113, 1
      %p117 = scmp.eq.s32.totalorder %s16, 1
      %p118 = scmp.ne.s32.totalorder %s113, %s115
      %p119 = scmp.eq.s32.totalorder %s16, 0
      %p120 = por %p118, %p119
      %p121 = scmp.ne.s32.totalorder %s113, %s115
      %p122 = scmp.eq.s32.totalorder %s21, 1
      %p123 = por %p121, %p122
      %p124 = scmp.ne.s32.totalorder %s115, %s116
      %p125 = scmp.eq.s32.totalorder %s21, 0
      %p126 = por %p124, %p125
      %p127 = scmp.ne.s32.totalorder %s115, %s116
      %p128 = scmp.eq.s32.totalorder %s22, 1
      %p129 = por %p127, %p128
      %p131 = scmp.ne.s32.totalorder %s116, %s130
      %p132 = scmp.eq.s32.totalorder %s22, 0
      %p133 = por %p131, %p132
      %s135 = sadd.s32 %s134, 1
      %p138 = scmp.eq.s32.totalorder %s16, 1
      %p139 = scmp.ne.s32.totalorder %s134, %s136
      %p140 = scmp.eq.s32.totalorder %s16, 0
      %p141 = por %p139, %p140
      %p142 = scmp.ne.s32.totalorder %s134, %s136
      %p143 = scmp.eq.s32.totalorder %s21, 1
      %p144 = por %p142, %p143
      %p145 = scmp.ne.s32.totalorder %s136, %s137
      %p146 = scmp.eq.s32.totalorder %s21, 0
      %p147 = por %p145, %p146
      %p148 = scmp.ne.s32.totalorder %s136, %s137
      %p149 = scmp.eq.s32.totalorder %s22, 1
      %p150 = por %p148, %p149
      %p152 = scmp.ne.s32.totalorder %s137, %s151
      %p153 = scmp.eq.s32.totalorder %s22, 0
      %p154 = por %p152, %p153
      %s156 = sadd.s32 %s155, 1
      %p159 = scmp.eq.s32.totalorder %s16, 1
      %p160 = scmp.ne.s32.totalorder %s155, %s157
      %p161 = scmp.eq.s32.totalorder %s16, 0
      %p162 = por %p160, %p161
      %p163 = scmp.ne.s32.totalorder %s155, %s157
      %p164 = scmp.eq.s32.totalorder %s21, 1
      %p165 = por %p163, %p164
      %p166 = scmp.ne.s32.totalorder %s157, %s158
      %p167 = scmp.eq.s32.totalorder %s21, 0
      %p168 = por %p166, %p167
      %p169 = scmp.ne.s32.totalorder %s157, %s158
      %p170 = scmp.eq.s32.totalorder %s22, 1
      %p171 = por %p169, %p170
      %p173 = scmp.ne.s32.totalorder %s158, %s172
      %p174 = scmp.eq.s32.totalorder %s22, 0
      %p175 = por %p173, %p174
      %s176 = ssub.s32 %s16, %s23
      %p177 = scmp.eq.s32.totalorder %s176, 0
      %s179 = sadd.s32 %s178, 1
      %s180 = scalar_select %p177, %s178, %s179
      %p183 = pneg %p177
      %p184 = scmp.eq.s32.totalorder %s16, 1
      %p185 = por %p183, %p184
      %p186 = scmp.ne.s32.totalorder %s178, %s181
      %p187 = scmp.eq.s32.totalorder %s16, 0
      %p188 = por %p186, %p187
      %p189 = scmp.ne.s32.totalorder %s178, %s181
      %p190 = scmp.eq.s32.totalorder %s21, 1
      %p191 = por %p189, %p190
      %p192 = scmp.ne.s32.totalorder %s181, %s182
      %p193 = scmp.eq.s32.totalorder %s21, 0
      %p194 = por %p192, %p193
      %p195 = scmp.ne.s32.totalorder %s181, %s182
      %p196 = scmp.eq.s32.totalorder %s22, 1
      %p197 = por %p195, %p196
      %p199 = scmp.ne.s32.totalorder %s182, %s198
      %p200 = scmp.eq.s32.totalorder %s22, 0
      %p201 = por %p199, %p200
      %p202 = scmp.le.s32.totalorder 1, %s16
      %p203 = scmp.lt.s32.totalorder %s16, 3
      %p204 = pnand %p202, %p203
      %p205 = pneg %p204
      // Predicated region
      $region9: #{tpu_custom_call.1} parent=5 // pred_check
        _
      $region10: #{tpu_custom_call.1} parent=5 // pred_check_branch
        %207 = sbr.rel (%p204) target = $region12
      $region11: #{tpu_custom_call.1} parent=5 // pred_region
        %s208 = ssub.s32 %s16, 1
        // Predicated region
        $region13: #{tpu_custom_call.1} parent=11 // pred_check
          %p209 = pneg %p63
        $region14: #{tpu_custom_call.1} parent=11 // pred_check_branch
          %211 = sbr.rel (%p209) target = $region16
        $region15: #{tpu_custom_call.1} parent=11 // pred_region
          _
        $region16: #{tpu_custom_call.1} parent=11 // pred_fallthru
          _
        // Predicated region
        $region17: #{tpu_custom_call.1} parent=11 // pred_check
          %p212 = pneg %p84
        $region18: #{tpu_custom_call.1} parent=11 // pred_check_branch
          %214 = sbr.rel (%p212) target = $region20
        $region19: #{tpu_custom_call.1} parent=11 // pred_region
          _
        $region20: #{tpu_custom_call.1} parent=11 // pred_fallthru
          _
        // Predicated region
        $region21: #{tpu_custom_call.1} parent=11 // pred_check
          %p215 = pneg %p105
        $region22: #{tpu_custom_call.1} parent=11 // pred_check_branch
          %217 = sbr.rel (%p215) target = $region24
        $region23: #{tpu_custom_call.1} parent=11 // pred_region
          _
        $region24: #{tpu_custom_call.1} parent=11 // pred_fallthru
          _
        // Predicated region
        $region25: #{tpu_custom_call.1} parent=11 // pred_check
          %p218 = pneg %p126
        $region26: #{tpu_custom_call.1} parent=11 // pred_check_branch
          %220 = sbr.rel (%p218) target = $region28
        $region27: #{tpu_custom_call.1} parent=11 // pred_region
          _
        $region28: #{tpu_custom_call.1} parent=11 // pred_fallthru
          _
        // Predicated region
        $region29: #{tpu_custom_call.1} parent=11 // pred_check
          %p221 = pneg %p147
        $region30: #{tpu_custom_call.1} parent=11 // pred_check_branch
          %223 = sbr.rel (%p221) target = $region32
        $region31: #{tpu_custom_call.1} parent=11 // pred_region
          _
        $region32: #{tpu_custom_call.1} parent=11 // pred_fallthru
          _
        // Predicated region
        $region33: #{tpu_custom_call.1} parent=11 // pred_check
          %p224 = pneg %p168
        $region34: #{tpu_custom_call.1} parent=11 // pred_check_branch
          %226 = sbr.rel (%p224) target = $region36
        $region35: #{tpu_custom_call.1} parent=11 // pred_region
          _
        $region36: #{tpu_custom_call.1} parent=11 // pred_fallthru
          _
      $region12: #{tpu_custom_call.1} parent=5 // pred_fallthru
        _
      %p227 = scmp.lt.s32.totalorder %s16, 2
      // Predicated region
      $region37: #{tpu_custom_call.1} parent=5 // pred_check
        %p228 = pneg %p227
      $region38: #{tpu_custom_call.1} parent=5 // pred_check_branch
        %230 = sbr.rel (%p228) target = $region40
      $region39: #{tpu_custom_call.1} parent=5 // pred_region
        // Predicated region
        $region41: #{tpu_custom_call.1} parent=39 // pred_check
          %p231 = pneg %p36
        $region42: #{tpu_custom_call.1} parent=39 // pred_check_branch
          %233 = sbr.rel (%p231) target = $region44
        $region43: #{tpu_custom_call.1} parent=39 // pred_region
          %p234 = scmp.lt.s32.totalorder %s16, 1
          %s235 = scalar_select %p234, %s16, 1
          %s236 = smul.addr %s235, 3
          %s237 = smul.addr %s236, 4
          %s238 = scalar_lea.vmem %s0, %s237
        $region44: #{tpu_custom_call.1} parent=39 // pred_fallthru
          _
      $region40: #{tpu_custom_call.1} parent=5 // pred_fallthru
        _
      %p239 = scmp.le.s32.totalorder 1, %s16
      %p240 = scmp.lt.s32.totalorder %s16, 3
      %p241 = pnand %p239, %p240
      %p242 = pneg %p241
      // Predicated region
      $region45: #{tpu_custom_call.1} parent=5 // pred_check
        _
      $region46: #{tpu_custom_call.1} parent=5 // pred_check_branch
        %244 = sbr.rel (%p241) target = $region48
      $region47: #{tpu_custom_call.1} parent=5 // pred_region
        %s245 = ssub.s32 %s16, 1
        %p246 = scmp.lt.s32.totalorder %s21, 1
        %s247 = scalar_select %p246, %s21, 1
        %s248 = smul.addr %s247, 3
        %s249 = smul.addr %s248, 4
        %s250 = scalar_lea.vmem %s0, %s249
        %p251 = pneg %p42
        %p252 = pneg %p39
        %p253 = pneg %p63
        %p254 = pneg %p60
        %p255 = pneg %p84
        %p256 = pneg %p81
        %p257 = pneg %p105
        %p258 = pneg %p102
        %p259 = pneg %p126
        %p260 = pneg %p123
        %p261 = pneg %p147
        %p262 = pneg %p144
        %p263 = pneg %p168
        %p264 = pneg %p165
        %p265 = pneg %p194
        %p266 = pneg %p191
        %s267 = sand.u32 %s181, 1
        %s268 = scalar_lea.sflag [#allocation3], %s267
        %s269 = sand.u32 %s181, 1
        %s270 = smul.addr %s269, 8
        %s271 = scalar_lea.vmem [#allocation2], %s270
        %p272 = scmp.lt.s32.totalorder %s21, 1
        %s273 = scalar_select %p272, %s21, 1
        %s274 = smul.addr %s273, 3
        %s275 = smul.addr %s274, 4
        %s276 = scalar_lea.vmem %s0, %s275
        %v278 = vld [vmem:[%s276] sm:$0xff]
        %v279 = vld [vmem:[%s276 + $0x8] sm:$0xf]
        %v280 = vld [vmem:[%s1] sm:$0xf]
        %v281 = vld [vmem:[%s1 + $0x4] sm:$0xf]
        %v282 = vld [vmem:[%s1 + $0x8] sm:$0xf]
        %v283 = vld [vmem:[%s1 + $0xc] sm:$0xf]
        %v284 = vld [vmem:[%s1 + $0x10] sm:$0xf]
        %v285 = vld [vmem:[%s1 + $0x14] sm:$0xf]
        %v286 = vld [vmem:[%s1 + $0x18] sm:$0xf]
        %v287 = vld [vmem:[%s1 + $0x1c] sm:$0xf]
        %v288 = vld [vmem:[%s1 + $0x20] sm:$0xf]
        %v289 = vld [vmem:[%s1 + $0x24] sm:$0xf]
        %v290 = vld [vmem:[%s1 + $0x28] sm:$0xf]
        %v291 = vld [vmem:[%s1 + $0x2c] sm:$0xf]
        %v292 = vld [vmem:[%s1 + $0x30] sm:$0xf]
        %v293 = vld [vmem:[%s1 + $0x34] sm:$0xf]
        %v294 = vld [vmem:[%s1 + $0x38] sm:$0xf]
        %v295 = vld [vmem:[%s1 + $0x3c] sm:$0xf]
        %v296 = vld [vmem:[%s1 + $0x40] sm:$0xf]
        %v297 = vld [vmem:[%s1 + $0x44] sm:$0xf]
        %v298 = vld [vmem:[%s1 + $0x48] sm:$0xf]
        %v299 = vld [vmem:[%s1 + $0x4c] sm:$0xf]
        %v300 = vld [vmem:[%s1 + $0x50] sm:$0xf]
        %v301 = vld [vmem:[%s1 + $0x54] sm:$0xf]
        %v302 = vld [vmem:[%s1 + $0x58] sm:$0xf]
        %v303 = vld [vmem:[%s1 + $0x5c] sm:$0xf]
        %v304 = vld [vmem:[%s1 + $0x60] sm:$0xf]
        %v305 = vld [vmem:[%s1 + $0x64] sm:$0xf]
        %v306 = vld [vmem:[%s1 + $0x68] sm:$0xf]
        %v307 = vld [vmem:[%s1 + $0x6c] sm:$0xf]
        %v308 = vld [vmem:[%s1 + $0x70] sm:$0xf]
        %v309 = vld [vmem:[%s1 + $0x74] sm:$0xf]
        %v310 = vld [vmem:[%s1 + $0x78] sm:$0xf]
        %v311 = vld [vmem:[%s1 + $0x7c] sm:$0xf]
        %v312 = vld [vmem:[%s1 + $0x80] sm:$0xf]
        %v313 = vld [vmem:[%s1 + $0x84] sm:$0xf]
        %v314 = vld [vmem:[%s1 + $0x88] sm:$0xf]
        %v315 = vld [vmem:[%s1 + $0x8c] sm:$0xf]
        %v316 = vld [vmem:[%s1 + $0x90] sm:$0xf]
        %v317 = vld [vmem:[%s1 + $0x94] sm:$0xf]
        %v318 = vld [vmem:[%s1 + $0x98] sm:$0xf]
        %v319 = vld [vmem:[%s1 + $0x9c] sm:$0xf]
        %v320 = vld [vmem:[%s1 + $0xa0] sm:$0xf]
        %v321 = vld [vmem:[%s1 + $0xa4] sm:$0xf]
        %v322 = vld [vmem:[%s1 + $0xa8] sm:$0xf]
        %v323 = vld [vmem:[%s1 + $0xac] sm:$0xf]
        %v324 = vld [vmem:[%s2] sm:$0x1]
        %v326 = vperm.slane %v324, 0
        %v330 = vunpack.c.l.b16 %v278
        %v331 = vunpack.c.h.b16 %v278
        %v332 = vunpack.c.l.b16 %v279
        %v333 = vpack.c.b16 %v330, %v330
        %v334 = vpack.c.b16 %v331, %v331
        %v335 = vpack.c.b16 %v332, %v332
        %v382 = vunpack.c.l.b16 %v280
        %v383 = vunpack.c.l.b16 %v281
        %v384 = vunpack.c.l.b16 %v282
        %v385 = vunpack.c.l.b16 %v283
        %v386 = vunpack.c.l.b16 %v284
        %v387 = vunpack.c.l.b16 %v285
        %v388 = vunpack.c.l.b16 %v286
        %v389 = vunpack.c.l.b16 %v287
        %v390 = vunpack.c.l.b16 %v288
        %v391 = vunpack.c.l.b16 %v289
        %v392 = vunpack.c.l.b16 %v290
        %v393 = vunpack.c.l.b16 %v291
        %v394 = vunpack.c.l.b16 %v292
        %v395 = vunpack.c.l.b16 %v293
        %v396 = vunpack.c.l.b16 %v294
        %v397 = vunpack.c.l.b16 %v295
        %v398 = vunpack.c.l.b16 %v296
        %v399 = vunpack.c.l.b16 %v297
        %v400 = vunpack.c.l.b16 %v298
        %v401 = vunpack.c.l.b16 %v299
        %v402 = vunpack.c.l.b16 %v300
        %v403 = vunpack.c.l.b16 %v301
        %v404 = vunpack.c.l.b16 %v302
        %v405 = vunpack.c.l.b16 %v303
        %v406 = vunpack.c.l.b16 %v304
        %v407 = vunpack.c.l.b16 %v305
        %v408 = vunpack.c.l.b16 %v306
        %v409 = vunpack.c.l.b16 %v307
        %v410 = vunpack.c.l.b16 %v308
        %v411 = vunpack.c.l.b16 %v309
        %v412 = vunpack.c.l.b16 %v310
        %v413 = vunpack.c.l.b16 %v311
        %v414 = vunpack.c.l.b16 %v312
        %v415 = vunpack.c.l.b16 %v313
        %v416 = vunpack.c.l.b16 %v314
        %v417 = vunpack.c.l.b16 %v315
        %v418 = vunpack.c.l.b16 %v316
        %v419 = vunpack.c.l.b16 %v317
        %v420 = vunpack.c.l.b16 %v318
        %v421 = vunpack.c.l.b16 %v319
        %v422 = vunpack.c.l.b16 %v320
        %v423 = vunpack.c.l.b16 %v321
        %v424 = vunpack.c.l.b16 %v322
        %v425 = vunpack.c.l.b16 %v323
        %v426 = vpack.c.b16 %v383, %v382
        %v427 = vpack.c.b16 %v385, %v384
        %v428 = vpack.c.b16 %v387, %v386
        %v429 = vpack.c.b16 %v389, %v388
        %v430 = vpack.c.b16 %v391, %v390
        %v431 = vpack.c.b16 %v393, %v392
        %v432 = vpack.c.b16 %v395, %v394
        %v433 = vpack.c.b16 %v397, %v396
        %v434 = vpack.c.b16 %v399, %v398
        %v435 = vpack.c.b16 %v401, %v400
        %v436 = vpack.c.b16 %v403, %v402
        %v437 = vpack.c.b16 %v405, %v404
        %v438 = vpack.c.b16 %v407, %v406
        %v439 = vpack.c.b16 %v409, %v408
        %v440 = vpack.c.b16 %v411, %v410
        %v441 = vpack.c.b16 %v413, %v412
        %v442 = vpack.c.b16 %v415, %v414
        %v443 = vpack.c.b16 %v417, %v416
        %v444 = vpack.c.b16 %v419, %v418
        %v445 = vpack.c.b16 %v421, %v420
        %v446 = vpack.c.b16 %v423, %v422
        %v447 = vpack.c.b16 %v425, %v424
        %vm469 = vcmask 777216
        %v471 = vsel %vm469, %v335, 0
        %vm473 = vcmask 1046528
        %vm474 = vcmask 1047552
        %v475 = vsel %vm473, 4294967295, 65535
        %v476 = vsel %vm474, %v475, 0
        %v478 = vand.u32 %v447, %v476
        %480 = vmatpush.bf16.msra.mxu0 %v433
        %481 = vmatpush.bf16.msra.mxu0 %v432
        %482 = vmatpush.bf16.msra.mxu0 %v431
        %483 = vmatpush.bf16.msra.mxu0 %v430
        %484 = vmatpush.bf16.msra.mxu0 %v429
        %485 = vmatpush.bf16.msra.mxu0 %v428
        %486 = vmatpush.bf16.msra.mxu0 %v427
        %487 = vmatpush.bf16.msra.mxu0 %v426
        %488 = vmatmul.bf16.gmra.mxu0 %v333
        %v489 = vpop.f32.mrf.mxu0
        %v490 = vadd.f32 %v326, %v489
        %v491 = vpop.f32.mrf.mxu0
        %492 = vdwg.mxu0
        %493 = vmatpush.bf16.msra.mxu0 %v441
        %494 = vmatpush.bf16.msra.mxu0 %v440
        %495 = vmatpush.bf16.msra.mxu0 %v439
        %496 = vmatpush.bf16.msra.mxu0 %v438
        %497 = vmatpush.bf16.msra.mxu0 %v437
        %498 = vmatpush.bf16.msra.mxu0 %v436
        %499 = vmatpush.bf16.msra.mxu0 %v435
        %500 = vmatpush.bf16.msra.mxu0 %v434
        %501 = vmatmul.bf16.gmra.mxu0 %v334
        %v502 = vpop.f32.mrf.mxu0
        %v503 = vadd.f32 %v490, %v502
        %v504 = vpop.f32.mrf.mxu0
        %505 = vdwg.mxu0
        %506 = vmatpush.bf16.msra.mxu0 0
        %507 = vmatpush.bf16.msra.mxu0 0
        %508 = vmatpush.bf16.msra.mxu0 %v478
        %509 = vmatpush.bf16.msra.mxu0 %v446
        %510 = vmatpush.bf16.msra.mxu0 %v445
        %511 = vmatpush.bf16.msra.mxu0 %v444
        %512 = vmatpush.bf16.msra.mxu0 %v443
        %513 = vmatpush.bf16.msra.mxu0 %v442
        %514 = vmatmul.bf16.gmra.mxu0 %v471
        %v515 = vpop.f32.mrf.mxu0
        %v516 = vadd.f32 %v503, %v515
        %v517 = vpop.f32.mrf.mxu0
        %518 = vdwg.mxu0
        %v519 = vmax.f32 %v516, 0.0
        %v520 = vpack.c.bf16 %v519, %v519
        %v521 = vld [vmem:[%s3] sm:$0xf]
        %v522 = vld [vmem:[%s3 + $0x4] sm:$0xf]
        %v523 = vld [vmem:[%s3 + $0x8] sm:$0xf]
        %v524 = vld [vmem:[%s3 + $0xc] sm:$0xf]
        %v525 = vld [vmem:[%s3 + $0x10] sm:$0xf]
        %v526 = vld [vmem:[%s3 + $0x14] sm:$0xf]
        %v527 = vld [vmem:[%s3 + $0x18] sm:$0xf]
        %v528 = vld [vmem:[%s3 + $0x1c] sm:$0xf]
        %v529 = vld [vmem:[%s4] sm:$0x1]
        %v531 = vperm.slane %v529, 0
        %v541 = vunpack.c.l.b16 %v521
        %v542 = vunpack.c.l.b16 %v522
        %v543 = vunpack.c.l.b16 %v523
        %v544 = vunpack.c.l.b16 %v524
        %v545 = vunpack.c.l.b16 %v525
        %v546 = vunpack.c.l.b16 %v526
        %v547 = vunpack.c.l.b16 %v527
        %v548 = vunpack.c.l.b16 %v528
        %v549 = vpack.c.b16 %v542, %v541
        %v550 = vpack.c.b16 %v544, %v543
        %v551 = vpack.c.b16 %v546, %v545
        %v552 = vpack.c.b16 %v548, %v547
        %vm557 = vcmask 523264
        %v559 = vsel %vm557, %v520, 0
        %561 = vmatpush.bf16.msra.mxu0 0
        %562 = vmatpush.bf16.msra.mxu0 0
        %563 = vmatpush.bf16.msra.mxu0 0
        %564 = vmatpush.bf16.msra.mxu0 0
        %565 = vmatpush.bf16.msra.mxu0 %v552
        %566 = vmatpush.bf16.msra.mxu0 %v551
        %567 = vmatpush.bf16.msra.mxu0 %v550
        %568 = vmatpush.bf16.msra.mxu0 %v549
        %569 = vmatmul.bf16.gmra.mxu0 %v559
        %v570 = vpop.f32.mrf.mxu0
        %v571 = vadd.f32 %v531, %v570
        %v572 = vpop.f32.mrf.mxu0
        %573 = vdwg.mxu0
        %v574 = vmax.f32 %v571, 0.0
        %v575 = vpack.c.bf16 %v574, %v574
        %v576 = vld [vmem:[%s5] sm:$0xf]
        %v577 = vld [vmem:[%s5 + $0x4] sm:$0xf]
        %v578 = vld [vmem:[%s5 + $0x8] sm:$0xf]
        %v579 = vld [vmem:[%s5 + $0xc] sm:$0xf]
        %v580 = vld [vmem:[%s5 + $0x10] sm:$0xf]
        %v581 = vld [vmem:[%s5 + $0x14] sm:$0xf]
        %v582 = vld [vmem:[%s5 + $0x18] sm:$0xf]
        %v583 = vld [vmem:[%s5 + $0x1c] sm:$0xf]
        %v584 = vld [vmem:[%s6] sm:$0x1]
        %v586 = vperm.slane %v584, 0
        %v596 = vunpack.c.l.b16 %v576
        %v597 = vunpack.c.l.b16 %v577
        %v598 = vunpack.c.l.b16 %v578
        %v599 = vunpack.c.l.b16 %v579
        %v600 = vunpack.c.l.b16 %v580
        %v601 = vunpack.c.l.b16 %v581
        %v602 = vunpack.c.l.b16 %v582
        %v603 = vunpack.c.l.b16 %v583
        %v604 = vpack.c.b16 %v597, %v596
        %v605 = vpack.c.b16 %v599, %v598
        %v606 = vpack.c.b16 %v601, %v600
        %v607 = vpack.c.b16 %v603, %v602
        %v613 = vsel %vm557, %v575, 0
        %615 = vmatpush.bf16.msra.mxu0 0
        %616 = vmatpush.bf16.msra.mxu0 0
        %617 = vmatpush.bf16.msra.mxu0 0
        %618 = vmatpush.bf16.msra.mxu0 0
        %619 = vmatpush.bf16.msra.mxu0 %v607
        %620 = vmatpush.bf16.msra.mxu0 %v606
        %621 = vmatpush.bf16.msra.mxu0 %v605
        %622 = vmatpush.bf16.msra.mxu0 %v604
        %623 = vmatmul.bf16.gmra.mxu0 %v613
        %v624 = vpop.f32.mrf.mxu0
        %v625 = vadd.f32 %v586, %v624
        %v626 = vpop.f32.mrf.mxu0
        %627 = vdwg.mxu0
        %vm628 = vcmask 146432
        %v629 = vsel %vm628, %v625, -inf
        %630 = vmax.xlane.f32.xlu0 %v629
        %v631 = vpop.xlane.xlu0 %630
        %v632 = vsub.f32 %v625, %v631
        %v633 = vmul.f32 %v632, 1.442695
        %v634 = vpow.pop %v633
        %v635 = vsel %vm628, %v634, 0.0
        %636 = vadd.xlane.f32.xlu0 %v635
        %v637 = vpop.xlane.xlu0 %636
        %v638 = vrcp.pop %v637
        %v639 = vmul.f32 %v637, %v638
        %v640 = vsub.f32 1.0, %v639
        %v641 = vmul.f32 %v638, %v640
        %v642 = vadd.f32 %v638, %v641
        %vm643 = vweird.f32 %v637
        %vm644 = vweird.f32 %v638
        %vm645 = vmor %vm643, %vm644
        %v646 = vsel %vm645, %v638, %v642
        %v647 = vand.u32 2147483647, %v637
        %vm648 = vcmp.eq.f32.partialorder %v647, 8.507059e+37
        %v649 = vand.u32 %v637, 2147483648
        %v650 = vor.u32 1.1754944e-38, %v649
        %v651 = vsel %vm648, %v650, %v646
        %v652 = vmul.f32 %v634, %v651
        %653 = vst.msk [vmem:[%s271] sm:$0xff] %vm628, %v652
        %s654 = sand.u32 %s181, 1
        %s655 = scalar_lea.sflag [#allocation3], %s654
        %s656 = sand.u32 %s181, 1
        %s657 = smul.addr %s656, 8
        %s658 = scalar_lea.vmem [#allocation2], %s657
        // Predicated region
        $region49: #{tpu_custom_call.1} parent=47 // pred_check
          %p659 = pneg %p191
        $region50: #{tpu_custom_call.1} parent=47 // pred_check_branch
          %661 = sbr.rel (%p659) target = $region52
        $region51: #{tpu_custom_call.1} parent=47 // pred_region
          %663 = vsyncadd %s655, 0
          %s664 = smul.addr %s21, 8
          %s665 = scalar_lea.hbm %s7, %s664
          %s667 = sshll.u32 %s658, 4
          %s668 = int_to_ptr.vmem [resolvable:$true] %s667
          %s669 = sshll.u32 %s665, 4
          %s670 = int_to_ptr.hbm [resolvable:$true] %s669
          %672 = dma.vmem_to_hbm [thread:$0]  %s668, 128, %s670, %s655
        $region52: #{tpu_custom_call.1} parent=47 // pred_fallthru
          _
      $region48: #{tpu_custom_call.1} parent=5 // pred_fallthru
        _
      %p673 = scmp.le.s32.totalorder 2, %s16
      // Predicated region
      $region53: #{tpu_custom_call.1} parent=5 // pred_check
        %p674 = pneg %p673
      $region54: #{tpu_custom_call.1} parent=5 // pred_check_branch
        %676 = sbr.rel (%p674) target = $region56
      $region55: #{tpu_custom_call.1} parent=5 // pred_region
        %s677 = ssub.s32 %s16, 2
        // Predicated region
        $region57: #{tpu_custom_call.1} parent=55 // pred_check
          %p678 = pneg %p197
        $region58: #{tpu_custom_call.1} parent=55 // pred_check_branch
          %680 = sbr.rel (%p678) target = $region60
        $region59: #{tpu_custom_call.1} parent=55 // pred_region
          %s681 = sand.u32 %s182, 1
          %s682 = scalar_lea.sflag [#allocation3], %s681
          %s683 = sand.u32 %s182, 1
          %s684 = smul.addr %s683, 8
          %s685 = scalar_lea.vmem [#allocation2], %s684
          %687 = dma.done %s682, 128
        $region60: #{tpu_custom_call.1} parent=55 // pred_fallthru
          _
      $region56: #{tpu_custom_call.1} parent=5 // pred_fallthru
        _
    $region6: #{tpu_custom_call.1} parent=1 // loop_footer
      %s20 = sadd.s32 1, %s16
    $region7: #{tpu_custom_call.1} parent=1 // loop_footer_branch
      %15 = sbr.rel target = $region3
    $region8: #{tpu_custom_call.1} parent=1 // loop_exit
      _
    %688 = vsyncpa [#allocation3], 1
    %s689 = scalar_lea.sflag [#allocation3], 1
    %690 = vsyncpa %s689, 1

</llo_original>
